<compile_context>
chip_gen: v7x
topology: tpu7x:2x2x1
jax: 0.10.0
libtpu: 0.0.40
codegen_flags: <defaults>
</compile_context>

<pallas_src>
import jax
import jax.numpy as jnp
from jax import lax
from jax.experimental import pallas as pl
from jax.experimental.pallas import tpu as pltpu


def mlp_kernel(x_ref,
               w1_ref, b1_ref,
               w2_ref, b2_ref,
               w3_ref, b3_ref,
               w4_ref, b4_ref,
               out_ref):
    dt = w1_ref.dtype  # compute (matmul input) dtype, e.g. bf16

    # Layer 1: Linear(input_size -> 256) + ReLU   (f32 accumulate, f32 elementwise)
    h = jnp.dot(x_ref[...], w1_ref[...], preferred_element_type=jnp.float32)
    h = jnp.maximum(h + b1_ref[...], 0.0)
    # Dropout(0.5) -> identity in eval/inference mode.

    # Layer 2: Linear(256 -> 128) + ReLU
    h = jnp.dot(h.astype(dt), w2_ref[...], preferred_element_type=jnp.float32)
    h = jnp.maximum(h + b2_ref[...], 0.0)

    # Layer 3: Linear(128 -> 64) + ReLU
    h = jnp.dot(h.astype(dt), w3_ref[...], preferred_element_type=jnp.float32)
    h = jnp.maximum(h + b3_ref[...], 0.0)

    # Layer 4: Linear(64 -> 1) + Sigmoid.
    # w4 is stored as a (1, 64) row; contract the feature axis of h against it
    # so the result is a lane-dense (1, TB) row instead of a (TB, 1) column.
    logits = lax.dot_general(
        w4_ref[...], h.astype(dt),
        dimension_numbers=(((1,), (1,)), ((), ())),
        preferred_element_type=jnp.float32)          # (1, TB)
    out_ref[...] = jax.nn.sigmoid(logits + b4_ref[...]).astype(out_ref.dtype)


def salary_predictor_forward(x, params, *, block_b=256,
                             compute_dtype=jnp.bfloat16):
    """x: [B, input_size] float32. params: dict of (w, b) per layer,
    weights stored as [in, out]. Returns [B, 1] float32 (sigmoid outputs)."""
    B, F = x.shape
    w1, b1 = params["fc1"]
    w2, b2 = params["fc2"]
    w3, b3 = params["fc3"]
    w4, b4 = params["fc4"]

    H1, H2, H3 = w1.shape[1], w2.shape[1], w3.shape[1]

    # Pad the batch to a multiple of the tile size; padded rows are discarded.
    num_tiles = pl.cdiv(B, block_b)
    padded_b = num_tiles * block_b
    if padded_b != B:
        x = jnp.pad(x, ((0, padded_b - B), (0, 0)))

    # bf16 matmul inputs (MXU), f32 biases (VPU elementwise stays f32).
    xc = x.astype(compute_dtype)
    w1c = w1.astype(compute_dtype)
    w2c = w2.astype(compute_dtype)
    w3c = w3.astype(compute_dtype)
    w4_row = w4.T.astype(compute_dtype)              # (1, 64)
    b1f, b2f, b3f, b4f = (b.astype(jnp.float32) for b in (b1, b2, b3, b4))

    const = lambda i: (0, 0)                          # resident across grid steps
    in_specs = [
        pl.BlockSpec((block_b, F), lambda i: (i, 0)),  # x tile (double-buffered)
        pl.BlockSpec((F, H1), const), pl.BlockSpec((1, H1), const),
        pl.BlockSpec((H1, H2), const), pl.BlockSpec((1, H2), const),
        pl.BlockSpec((H2, H3), const), pl.BlockSpec((1, H3), const),
        pl.BlockSpec((1, H3), const), pl.BlockSpec((1, 1), const),
    ]
    out_specs = pl.BlockSpec((1, block_b), lambda i: (i, 0))  # lane-dense rows

    flops = 2 * padded_b * (F * H1 + H1 * H2 + H2 * H3 + H3 * 1)
    bytes_accessed = (
        xc.size * xc.dtype.itemsize
        + sum(a.size * a.dtype.itemsize
              for a in (w1c, w2c, w3c, w4_row, b1f, b2f, b3f, b4f))
        + padded_b * 4)
    cost = pl.CostEstimate(flops=flops, transcendentals=padded_b,
                           bytes_accessed=bytes_accessed)

    out = pl.pallas_call(
        mlp_kernel,
        out_shape=jax.ShapeDtypeStruct((num_tiles, block_b), jnp.float32),
        grid=(num_tiles,),
        in_specs=in_specs,
        out_specs=out_specs,
        compiler_params=pltpu.CompilerParams(
            dimension_semantics=("parallel",)),
        cost_estimate=cost,
    )(xc, w1c, b1f, w2c, b2f, w3c, b3f, w4_row, b4f)

    # (num_tiles, TB) rows are batch-ordered -> flatten, drop padding, column.
    return out.reshape(padded_b, 1)[:B]


def init_params(key, input_size):
    """Deterministic init mimicking PyTorch Linear default (uniform +-1/sqrt(in))."""
    dims = [(input_size, 256), (256, 128), (128, 64), (64, 1)]
    names = ["fc1", "fc2", "fc3", "fc4"]
    params = {}
    for name, (fan_in, fan_out) in zip(names, dims):
        key, kw, kb = jax.random.split(key, 3)
        bound = 1.0 / jnp.sqrt(fan_in)
        w = jax.random.uniform(kw, (fan_in, fan_out), jnp.float32, -bound, bound)
        b = jax.random.uniform(kb, (1, fan_out), jnp.float32, -bound, bound)
        params[name] = (w, b)
    return params


def reference_forward_f32(x, params):
    h = x
    for name in ["fc1", "fc2", "fc3"]:
        w, b = params[name]
        h = jnp.maximum(h @ w + b, 0.0)
    w, b = params["fc4"]
    return jax.nn.sigmoid(h @ w + b)


def reference_forward_mixed(x, params, compute_dtype=jnp.bfloat16):
    """Same precision policy as the kernel: bf16 matmul inputs, f32 accumulate,
    f32 elementwise."""
    h = x.astype(compute_dtype)
    for name in ["fc1", "fc2", "fc3"]:
        w, b = params[name]
        h = jnp.dot(h, w.astype(compute_dtype),
                    preferred_element_type=jnp.float32)
        h = jnp.maximum(h + b.astype(jnp.float32), 0.0).astype(compute_dtype)
    w, b = params["fc4"]
    logits = jnp.dot(h, w.astype(compute_dtype),
                     preferred_element_type=jnp.float32) + b.astype(jnp.float32)
    return jax.nn.sigmoid(logits)


if __name__ == "__main__":
    key = jax.random.PRNGKey(0)
    k_x, k_p = jax.random.split(key)

    batch = 8
    input_size = 32
    x = jax.random.normal(k_x, (batch, input_size), jnp.float32)
    params = init_params(k_p, input_size)

    out = salary_predictor_forward(x, params)
    out = jax.block_until_ready(out)
    assert out.shape == (batch, 1)

    # Tight check vs a reference using the kernel's precision policy.
    ref_mixed = reference_forward_mixed(x, params)
    assert jnp.allclose(out, ref_mixed, atol=1e-4, rtol=1e-4), (
        jnp.max(jnp.abs(out - ref_mixed)))

    # Loose sanity check vs the full-f32 PyTorch-equivalent reference.
    ref_f32 = reference_forward_f32(x, params)
    assert jnp.allclose(out, ref_f32, atol=3e-2, rtol=3e-2), (
        jnp.max(jnp.abs(out - ref_f32)))

    print("KERNEL_OK")
</pallas_src>

<mosaic_0001>
module attributes {stable_mosaic.version = 11 : i64} {
  func.func @mlp_kernel(%arg0: i32, %arg1: memref<256x32xbf16, #tpu.memory_space<vmem>>, %arg2: memref<32x256xbf16, #tpu.memory_space<vmem>>, %arg3: memref<1x256xf32, #tpu.memory_space<vmem>>, %arg4: memref<256x128xbf16, #tpu.memory_space<vmem>>, %arg5: memref<1x128xf32, #tpu.memory_space<vmem>>, %arg6: memref<128x64xbf16, #tpu.memory_space<vmem>>, %arg7: memref<1x64xf32, #tpu.memory_space<vmem>>, %arg8: memref<1x64xbf16, #tpu.memory_space<vmem>>, %arg9: memref<1x1xf32, #tpu.memory_space<vmem>>, %arg10: memref<1x256xf32, #tpu.memory_space<vmem>>) attributes {dimension_semantics = [#tpu.dimension_semantics<parallel>], iteration_bounds = array<i64: 1>, scalar_prefetch = 0 : i64, scratch_operands = 0 : i64, tpu.core_type = #tpu.core_type<tc>, window_params = [{transform_indices = @transform_0, window_bounds = array<i64: 256, 32>}, {pipeline_mode = #tpu.pipeline_mode<synchronous>, transform_indices = @transform_1, window_bounds = array<i64: 32, 256>}, {pipeline_mode = #tpu.pipeline_mode<synchronous>, transform_indices = @transform_2, window_bounds = array<i64: 1, 256>}, {pipeline_mode = #tpu.pipeline_mode<synchronous>, transform_indices = @transform_3, window_bounds = array<i64: 256, 128>}, {pipeline_mode = #tpu.pipeline_mode<synchronous>, transform_indices = @transform_4, window_bounds = array<i64: 1, 128>}, {pipeline_mode = #tpu.pipeline_mode<synchronous>, transform_indices = @transform_5, window_bounds = array<i64: 128, 64>}, {pipeline_mode = #tpu.pipeline_mode<synchronous>, transform_indices = @transform_6, window_bounds = array<i64: 1, 64>}, {pipeline_mode = #tpu.pipeline_mode<synchronous>, transform_indices = @transform_7, window_bounds = array<i64: 1, 64>}, {pipeline_mode = #tpu.pipeline_mode<synchronous>, transform_indices = @transform_8, window_bounds = array<i64: 1, 1>}, {transform_indices = @transform_9, window_bounds = array<i64: 1, 256>}]} {
    %c0 = arith.constant 0 : index
    %c0_0 = arith.constant 0 : index
    %0 = vector.load %arg1[%c0, %c0_0] : memref<256x32xbf16, #tpu.memory_space<vmem>>, vector<256x32xbf16>
    %c0_1 = arith.constant 0 : index
    %c0_2 = arith.constant 0 : index
    %1 = vector.load %arg2[%c0_1, %c0_2] : memref<32x256xbf16, #tpu.memory_space<vmem>>, vector<32x256xbf16>
    %cst = arith.constant dense<0.000000e+00> : vector<256x256xf32>
    %2 = tpu.matmul %0, %1, %cst {dimension_numbers = #tpu.dot_dimension_numbers<[1], [0], [0], [1], [0, 0, 1, 1], [], []>} : vector<256x32xbf16>, vector<32x256xbf16>, vector<256x256xf32> -> vector<256x256xf32>
    %c0_3 = arith.constant 0 : index
    %c0_4 = arith.constant 0 : index
    %3 = vector.load %arg3[%c0_3, %c0_4] : memref<1x256xf32, #tpu.memory_space<vmem>>, vector<1x256xf32>
    %4 = vector.broadcast %3 : vector<1x256xf32> to vector<256x256xf32>
    %5 = arith.addf %2, %4 : vector<256x256xf32>
    %cst_5 = arith.constant 0.000000e+00 : f32
    %6 = vector.broadcast %cst_5 : f32 to vector<256x256xf32>
    %7 = arith.maximumf %5, %6 : vector<256x256xf32>
    %8 = arith.truncf %7 : vector<256x256xf32> to vector<256x256xbf16>
    %c0_6 = arith.constant 0 : index
    %c0_7 = arith.constant 0 : index
    %9 = vector.load %arg4[%c0_6, %c0_7] : memref<256x128xbf16, #tpu.memory_space<vmem>>, vector<256x128xbf16>
    %cst_8 = arith.constant dense<0.000000e+00> : vector<256x128xf32>
    %10 = tpu.matmul %8, %9, %cst_8 {dimension_numbers = #tpu.dot_dimension_numbers<[1], [0], [0], [1], [0, 0, 1, 1], [], []>} : vector<256x256xbf16>, vector<256x128xbf16>, vector<256x128xf32> -> vector<256x128xf32>
    %c0_9 = arith.constant 0 : index
    %c0_10 = arith.constant 0 : index
    %11 = vector.load %arg5[%c0_9, %c0_10] : memref<1x128xf32, #tpu.memory_space<vmem>>, vector<1x128xf32>
    %12 = vector.broadcast %11 : vector<1x128xf32> to vector<256x128xf32>
    %13 = arith.addf %10, %12 : vector<256x128xf32>
    %cst_11 = arith.constant 0.000000e+00 : f32
    %14 = vector.broadcast %cst_11 : f32 to vector<256x128xf32>
    %15 = arith.maximumf %13, %14 : vector<256x128xf32>
    %16 = arith.truncf %15 : vector<256x128xf32> to vector<256x128xbf16>
    %c0_12 = arith.constant 0 : index
    %c0_13 = arith.constant 0 : index
    %17 = vector.load %arg6[%c0_12, %c0_13] : memref<128x64xbf16, #tpu.memory_space<vmem>>, vector<128x64xbf16>
    %cst_14 = arith.constant dense<0.000000e+00> : vector<256x64xf32>
    %18 = tpu.matmul %16, %17, %cst_14 {dimension_numbers = #tpu.dot_dimension_numbers<[1], [0], [0], [1], [0, 0, 1, 1], [], []>} : vector<256x128xbf16>, vector<128x64xbf16>, vector<256x64xf32> -> vector<256x64xf32>
    %c0_15 = arith.constant 0 : index
    %c0_16 = arith.constant 0 : index
    %19 = vector.load %arg7[%c0_15, %c0_16] : memref<1x64xf32, #tpu.memory_space<vmem>>, vector<1x64xf32>
    %20 = vector.broadcast %19 : vector<1x64xf32> to vector<256x64xf32>
    %21 = arith.addf %18, %20 : vector<256x64xf32>
    %cst_17 = arith.constant 0.000000e+00 : f32
    %22 = vector.broadcast %cst_17 : f32 to vector<256x64xf32>
    %23 = arith.maximumf %21, %22 : vector<256x64xf32>
    %c0_18 = arith.constant 0 : index
    %c0_19 = arith.constant 0 : index
    %24 = vector.load %arg8[%c0_18, %c0_19] : memref<1x64xbf16, #tpu.memory_space<vmem>>, vector<1x64xbf16>
    %25 = arith.truncf %23 : vector<256x64xf32> to vector<256x64xbf16>
    %cst_20 = arith.constant dense<0.000000e+00> : vector<1x256xf32>
    %26 = tpu.matmul %24, %25, %cst_20 {dimension_numbers = #tpu.dot_dimension_numbers<[1], [1], [0], [0], [0, 0, 1, 0], [], []>} : vector<1x64xbf16>, vector<256x64xbf16>, vector<1x256xf32> -> vector<1x256xf32>
    %c0_21 = arith.constant 0 : index
    %c0_22 = arith.constant 0 : index
    %27 = vector.load %arg9[%c0_21, %c0_22] : memref<1x1xf32, #tpu.memory_space<vmem>>, vector<1x1xf32>
    %28 = vector.broadcast %27 : vector<1x1xf32> to vector<1x256xf32>
    %29 = arith.addf %26, %28 : vector<1x256xf32>
    %30 = arith.negf %29 : vector<1x256xf32>
    %31 = math.exp %30 : vector<1x256xf32>
    %cst_23 = arith.constant 1.000000e+00 : f32
    %32 = vector.broadcast %cst_23 : f32 to vector<1x256xf32>
    %33 = arith.addf %32, %31 : vector<1x256xf32>
    %34 = arith.divf %32, %33 : vector<1x256xf32>
    %c0_24 = arith.constant 0 : index
    %c0_25 = arith.constant 0 : index
    %35 = vector.load %arg10[%c0_24, %c0_25] : memref<1x256xf32, #tpu.memory_space<vmem>>, vector<1x256xf32>
    tpu.vector_store %arg10[%c0_24, %c0_25], %34 {strides = array<i32>} : memref<1x256xf32, #tpu.memory_space<vmem>>, vector<1x256xf32>,
    return
  }
  func.func @transform_0(%arg0: i32) -> (i32, i32) {
    %c0_i32 = arith.constant 0 : i32
    %c0_i32_0 = arith.constant 0 : i32
    return %arg0, %c0_i32 : i32, i32
  }
  func.func @transform_1(%arg0: i32) -> (i32, i32) {
    %c0_i32 = arith.constant 0 : i32
    %c0_i32_0 = arith.constant 0 : i32
    %c0_i32_1 = arith.constant 0 : i32
    return %c0_i32, %c0_i32_0 : i32, i32
  }
  func.func @transform_2(%arg0: i32) -> (i32, i32) {
    %c0_i32 = arith.constant 0 : i32
    %c0_i32_0 = arith.constant 0 : i32
    %c0_i32_1 = arith.constant 0 : i32
    return %c0_i32, %c0_i32_0 : i32, i32
  }
  func.func @transform_3(%arg0: i32) -> (i32, i32) {
    %c0_i32 = arith.constant 0 : i32
    %c0_i32_0 = arith.constant 0 : i32
    %c0_i32_1 = arith.constant 0 : i32
    return %c0_i32, %c0_i32_0 : i32, i32
  }
  func.func @transform_4(%arg0: i32) -> (i32, i32) {
    %c0_i32 = arith.constant 0 : i32
    %c0_i32_0 = arith.constant 0 : i32
    %c0_i32_1 = arith.constant 0 : i32
    return %c0_i32, %c0_i32_0 : i32, i32
  }
  func.func @transform_5(%arg0: i32) -> (i32, i32) {
    %c0_i32 = arith.constant 0 : i32
    %c0_i32_0 = arith.constant 0 : i32
    %c0_i32_1 = arith.constant 0 : i32
    return %c0_i32, %c0_i32_0 : i32, i32
  }
  func.func @transform_6(%arg0: i32) -> (i32, i32) {
    %c0_i32 = arith.constant 0 : i32
    %c0_i32_0 = arith.constant 0 : i32
    %c0_i32_1 = arith.constant 0 : i32
    return %c0_i32, %c0_i32_0 : i32, i32
  }
  func.func @transform_7(%arg0: i32) -> (i32, i32) {
    %c0_i32 = arith.constant 0 : i32
    %c0_i32_0 = arith.constant 0 : i32
    %c0_i32_1 = arith.constant 0 : i32
    return %c0_i32, %c0_i32_0 : i32, i32
  }
  func.func @transform_8(%arg0: i32) -> (i32, i32) {
    %c0_i32 = arith.constant 0 : i32
    %c0_i32_0 = arith.constant 0 : i32
    %c0_i32_1 = arith.constant 0 : i32
    return %c0_i32, %c0_i32_0 : i32, i32
  }
  func.func @transform_9(%arg0: i32) -> (i32, i32) {
    %c0_i32 = arith.constant 0 : i32
    %c0_i32_0 = arith.constant 0 : i32
    return %arg0, %c0_i32 : i32, i32
  }
}

</mosaic_0001>

<llo_original>
// kernel: tpu_custom_call.1
$region0: #{tpu_custom_call.1}
  #allocation0 [shape = 'u32[]', space=smem, size = 0x4, offset = 0x4, fixed_abs, tag = 'smem constant byte address 0x4 - core index']
  #allocation1 [shape = 'u32[144,128]{1,0:T(1,128)}', space=vmem, size = 0x12000, scoped, tag = 'internal scratch']
  #allocation2 [shape = 'f32[1,1]{1,0:T(1,128)S(1)}', space=vmem, size = 0x200, scoped, tag = 'scoped memory for tpu_custom_call.1']
  %s0 = inlined_call_operand.vmem [shape: bf16[256,32], index: 0, kind: input, shape index: {}]
  %s1 = inlined_call_operand.vmem [shape: bf16[32,256], index: 1, kind: input, shape index: {}]
  %s2 = inlined_call_operand.vmem [shape: f32[1,256], index: 2, kind: input, shape index: {}]
  %s3 = inlined_call_operand.vmem [shape: bf16[256,128], index: 3, kind: input, shape index: {}]
  %s4 = inlined_call_operand.vmem [shape: f32[1,128], index: 4, kind: input, shape index: {}]
  %s5 = inlined_call_operand.vmem [shape: bf16[128,64], index: 5, kind: input, shape index: {}]
  %s6 = inlined_call_operand.vmem [shape: f32[1,64], index: 6, kind: input, shape index: {}]
  %s7 = inlined_call_operand.vmem [shape: bf16[1,64], index: 7, kind: input, shape index: {}]
  %s8 = inlined_call_operand.<no memory space> [shape: f32[1,1], index: 8, kind: input, shape index: {}]
  %s9 = inlined_call_operand.hbm [shape: f32[1,256], index: 9, kind: output, shape index: {}]
  %s10 = sld [smem:[#allocation0]]
  $region46: #{tpu_custom_call.1} parent=0
    _
  %s12 = ssub.s32 1, %s10
  %s13 = scalar_select 0, %s12, %s10
  %v14 = vstv %s8
  %15 = vst [vmem:[#allocation2] sm:$0x1] %v14
  $region1: #{tpu_custom_call.1} parent=0
    #allocation3 [shape = 'u8[1024]{0}', space=vmem, size = 0x400, scoped, tag = 'output window, operand 0, single buffered']
    #allocation4 [shape = 's32[1]{0}', space=sflag, size = 0x4, scoped, tag = 'scoped memory for tpu_custom_call.1']
    %16 = vsyncpa [#allocation4], 0
    // Predicated region
    $region2: #{tpu_custom_call.1} parent=1 // pred_check
      _
    $region3: #{tpu_custom_call.1} parent=1 // pred_check_branch
      %18 = sbr.rel (0) target = $region5
    $region4: #{tpu_custom_call.1} parent=1 // pred_region
      _
    $region5: #{tpu_custom_call.1} parent=1 // pred_fallthru
      _
    // Predicated region
    $region6: #{tpu_custom_call.1} parent=1 // pred_check
      _
    $region7: #{tpu_custom_call.1} parent=1 // pred_check_branch
      %20 = sbr.rel (0) target = $region9
    $region8: #{tpu_custom_call.1} parent=1 // pred_region
      _
    $region9: #{tpu_custom_call.1} parent=1 // pred_fallthru
      _
    // Predicated region
    $region10: #{tpu_custom_call.1} parent=1 // pred_check
      _
    $region11: #{tpu_custom_call.1} parent=1 // pred_check_branch
      %22 = sbr.rel (0) target = $region13
    $region12: #{tpu_custom_call.1} parent=1 // pred_region
      _
    $region13: #{tpu_custom_call.1} parent=1 // pred_fallthru
      _
    // Predicated region
    $region14: #{tpu_custom_call.1} parent=1 // pred_check
      _
    $region15: #{tpu_custom_call.1} parent=1 // pred_check_branch
      %24 = sbr.rel (0) target = $region17
    $region16: #{tpu_custom_call.1} parent=1 // pred_region
      _
    $region17: #{tpu_custom_call.1} parent=1 // pred_fallthru
      _
    // Predicated region
    $region18: #{tpu_custom_call.1} parent=1 // pred_check
      _
    $region19: #{tpu_custom_call.1} parent=1 // pred_check_branch
      %26 = sbr.rel (0) target = $region21
    $region20: #{tpu_custom_call.1} parent=1 // pred_region
      _
    $region21: #{tpu_custom_call.1} parent=1 // pred_fallthru
      _
    // Predicated region
    $region22: #{tpu_custom_call.1} parent=1 // pred_check
      _
    $region23: #{tpu_custom_call.1} parent=1 // pred_check_branch
      %28 = sbr.rel (0) target = $region25
    $region24: #{tpu_custom_call.1} parent=1 // pred_region
      _
    $region25: #{tpu_custom_call.1} parent=1 // pred_fallthru
      _
    // Predicated region
    $region26: #{tpu_custom_call.1} parent=1 // pred_check
      _
    $region27: #{tpu_custom_call.1} parent=1 // pred_check_branch
      %30 = sbr.rel (0) target = $region29
    $region28: #{tpu_custom_call.1} parent=1 // pred_region
      _
    $region29: #{tpu_custom_call.1} parent=1 // pred_fallthru
      _
    // Predicated region
    $region30: #{tpu_custom_call.1} parent=1 // pred_check
      _
    $region31: #{tpu_custom_call.1} parent=1 // pred_check_branch
      %32 = sbr.rel (0) target = $region33
    $region32: #{tpu_custom_call.1} parent=1 // pred_region
      _
    $region33: #{tpu_custom_call.1} parent=1 // pred_fallthru
      _
    // Predicated region
    $region34: #{tpu_custom_call.1} parent=1 // pred_check
      _
    $region35: #{tpu_custom_call.1} parent=1 // pred_check_branch
      %34 = sbr.rel (0) target = $region37
    $region36: #{tpu_custom_call.1} parent=1 // pred_region
      _
    $region37: #{tpu_custom_call.1} parent=1 // pred_fallthru
      _
    %v36 = vld [vmem:[%s0] sm:$0xf]
    %v37 = vld [vmem:[%s0 + $0x4] sm:$0xf]
    %v38 = vld [vmem:[%s0 + $0x8] sm:$0xf]
    %v39 = vld [vmem:[%s0 + $0xc] sm:$0xf]
    %v40 = vld [vmem:[%s0 + $0x10] sm:$0xf]
    %v41 = vld [vmem:[%s0 + $0x14] sm:$0xf]
    %v42 = vld [vmem:[%s0 + $0x18] sm:$0xf]
    %v43 = vld [vmem:[%s0 + $0x1c] sm:$0xf]
    %v44 = vld [vmem:[%s0 + $0x20] sm:$0xf]
    %v45 = vld [vmem:[%s0 + $0x24] sm:$0xf]
    %v46 = vld [vmem:[%s0 + $0x28] sm:$0xf]
    %v47 = vld [vmem:[%s0 + $0x2c] sm:$0xf]
    %v48 = vld [vmem:[%s0 + $0x30] sm:$0xf]
    %v49 = vld [vmem:[%s0 + $0x34] sm:$0xf]
    %v50 = vld [vmem:[%s0 + $0x38] sm:$0xf]
    %v51 = vld [vmem:[%s0 + $0x3c] sm:$0xf]
    %v52 = vld [vmem:[%s0 + $0x40] sm:$0xf]
    %v53 = vld [vmem:[%s0 + $0x44] sm:$0xf]
    %v54 = vld [vmem:[%s0 + $0x48] sm:$0xf]
    %v55 = vld [vmem:[%s0 + $0x4c] sm:$0xf]
    %v56 = vld [vmem:[%s0 + $0x50] sm:$0xf]
    %v57 = vld [vmem:[%s0 + $0x54] sm:$0xf]
    %v58 = vld [vmem:[%s0 + $0x58] sm:$0xf]
    %v59 = vld [vmem:[%s0 + $0x5c] sm:$0xf]
    %v60 = vld [vmem:[%s0 + $0x60] sm:$0xf]
    %v61 = vld [vmem:[%s0 + $0x64] sm:$0xf]
    %v62 = vld [vmem:[%s0 + $0x68] sm:$0xf]
    %v63 = vld [vmem:[%s0 + $0x6c] sm:$0xf]
    %v64 = vld [vmem:[%s0 + $0x70] sm:$0xf]
    %v65 = vld [vmem:[%s0 + $0x74] sm:$0xf]
    %v66 = vld [vmem:[%s0 + $0x78] sm:$0xf]
    %v67 = vld [vmem:[%s0 + $0x7c] sm:$0xf]
    %v68 = vld [vmem:[%s1] sm:$0xff]
    %v69 = vld [vmem:[%s1 + $0x8] sm:$0xff]
    %v70 = vld [vmem:[%s1 + $0x10] sm:$0xff]
    %v71 = vld [vmem:[%s1 + $0x18] sm:$0xff]
    %v72 = vld [vmem:[%s2] sm:$0x3]
    %v74 = vlaneseq
    %v75 = vshrl.u32 %v74, 7
    %v76 = vsub.s32 0, %v75
    %v77 = vrot.slane %v72, %v76
    %v78 = vlaneseq
    %v79 = vshrl.u32 %v78, 7
    %v80 = vsub.s32 1, %v79
    %v81 = vrot.slane %v72, %v80
    %v116 = vunpack.c.l.b16 %v36
    %v117 = vunpack.c.l.b16 %v37
    %v118 = vunpack.c.l.b16 %v38
    %v119 = vunpack.c.l.b16 %v39
    %v120 = vunpack.c.l.b16 %v40
    %v121 = vunpack.c.l.b16 %v41
    %v122 = vunpack.c.l.b16 %v42
    %v123 = vunpack.c.l.b16 %v43
    %v124 = vunpack.c.l.b16 %v44
    %v125 = vunpack.c.l.b16 %v45
    %v126 = vunpack.c.l.b16 %v46
    %v127 = vunpack.c.l.b16 %v47
    %v128 = vunpack.c.l.b16 %v48
    %v129 = vunpack.c.l.b16 %v49
    %v130 = vunpack.c.l.b16 %v50
    %v131 = vunpack.c.l.b16 %v51
    %v132 = vunpack.c.l.b16 %v52
    %v133 = vunpack.c.l.b16 %v53
    %v134 = vunpack.c.l.b16 %v54
    %v135 = vunpack.c.l.b16 %v55
    %v136 = vunpack.c.l.b16 %v56
    %v137 = vunpack.c.l.b16 %v57
    %v138 = vunpack.c.l.b16 %v58
    %v139 = vunpack.c.l.b16 %v59
    %v140 = vunpack.c.l.b16 %v60
    %v141 = vunpack.c.l.b16 %v61
    %v142 = vunpack.c.l.b16 %v62
    %v143 = vunpack.c.l.b16 %v63
    %v144 = vunpack.c.l.b16 %v64
    %v145 = vunpack.c.l.b16 %v65
    %v146 = vunpack.c.l.b16 %v66
    %v147 = vunpack.c.l.b16 %v67
    %v148 = vpack.c.b16 %v117, %v116
    %v149 = vpack.c.b16 %v119, %v118
    %v150 = vpack.c.b16 %v121, %v120
    %v151 = vpack.c.b16 %v123, %v122
    %v152 = vpack.c.b16 %v125, %v124
    %v153 = vpack.c.b16 %v127, %v126
    %v154 = vpack.c.b16 %v129, %v128
    %v155 = vpack.c.b16 %v131, %v130
    %v156 = vpack.c.b16 %v133, %v132
    %v157 = vpack.c.b16 %v135, %v134
    %v158 = vpack.c.b16 %v137, %v136
    %v159 = vpack.c.b16 %v139, %v138
    %v160 = vpack.c.b16 %v141, %v140
    %v161 = vpack.c.b16 %v143, %v142
    %v162 = vpack.c.b16 %v145, %v144
    %v163 = vpack.c.b16 %v147, %v146
    %v168 = vunpack.c.l.b16 %v68
    %v169 = vunpack.c.h.b16 %v68
    %v170 = vunpack.c.l.b16 %v69
    %v171 = vunpack.c.h.b16 %v69
    %v172 = vunpack.c.l.b16 %v70
    %v173 = vunpack.c.h.b16 %v70
    %v174 = vunpack.c.l.b16 %v71
    %v175 = vunpack.c.h.b16 %v71
    %v176 = vpack.c.b16 %v170, %v168
    %v177 = vpack.c.b16 %v171, %v169
    %v178 = vpack.c.b16 %v174, %v172
    %v179 = vpack.c.b16 %v175, %v173
    %vm184 = vcmask 261120
    %v186 = vsel %vm184, %v148, 0
    %v189 = vsel %vm184, %v149, 0
    %v192 = vsel %vm184, %v150, 0
    %v195 = vsel %vm184, %v151, 0
    %v198 = vsel %vm184, %v152, 0
    %v201 = vsel %vm184, %v153, 0
    %v204 = vsel %vm184, %v154, 0
    %v207 = vsel %vm184, %v155, 0
    %v210 = vsel %vm184, %v156, 0
    %v213 = vsel %vm184, %v157, 0
    %v216 = vsel %vm184, %v158, 0
    %v219 = vsel %vm184, %v159, 0
    %v222 = vsel %vm184, %v160, 0
    %v225 = vsel %vm184, %v161, 0
    %v228 = vsel %vm184, %v162, 0
    %v231 = vsel %vm184, %v163, 0
    %233 = vmatprep.subr.bf16.mxu0 %v177
    %234 = vmatpush1.bf16.msra.mxu0 %v176
    %235 = vmatprep.subr.bf16.mxu0 %v179
    %236 = vmatpush1.bf16.msra.mxu0 %v178
    %237 = vmatprep.subr.bf16.mxu0 0
    %238 = vmatpush1.bf16.msra.mxu0 0
    %239 = vmatprep.subr.bf16.mxu0 0
    %240 = vmatpush1.bf16.msra.mxu0 0
    %241 = vmatprep.subr.bf16.mxu0 0
    %242 = vmatpush1.bf16.msra.mxu0 0
    %243 = vmatprep.subr.bf16.mxu0 0
    %244 = vmatpush1.bf16.msra.mxu0 0
    %245 = vmatprep.subr.bf16.mxu0 0
    %246 = vmatpush1.bf16.msra.mxu0 0
    %247 = vmatprep.subr.bf16.mxu0 0
    %248 = vmatpush1.bf16.msra.mxu0 0
    %249 = vmatprep.subr.bf16.mxu0 0
    %250 = vmatpush1.bf16.msra.mxu0 0
    %251 = vmatprep.subr.bf16.mxu0 0
    %252 = vmatpush1.bf16.msra.mxu0 0
    %253 = vmatprep.subr.bf16.mxu0 0
    %254 = vmatpush1.bf16.msra.mxu0 0
    %255 = vmatprep.subr.bf16.mxu0 0
    %256 = vmatpush1.bf16.msra.mxu0 0
    %257 = vmatprep.subr.bf16.mxu0 0
    %258 = vmatpush1.bf16.msra.mxu0 0
    %259 = vmatprep.subr.bf16.mxu0 0
    %260 = vmatpush1.bf16.msra.mxu0 0
    %261 = vmatprep.subr.bf16.mxu0 0
    %262 = vmatpush1.bf16.msra.mxu0 0
    %263 = vmatprep.subr.bf16.mxu0 0
    %264 = vmatpush1.bf16.msra.mxu0 0
    %265 = vmatprep.mubr.bf16.mxu0 0
    %266 = vmatmul.mubr.bf16.gmra.mrb[0].mxu0 %v186
    %v267 = vpop.f32.mrb[0].mxu0
    %v268 = vadd.f32 %v77, %v267
    %v269 = vpop.f32.mrb[0].mxu0
    %v270 = vadd.f32 %v81, %v269
    %v271 = vpop.f32.mrb[0].mxu0
    %v272 = vadd.f32 %v77, %v271
    %v273 = vpop.f32.mrb[0].mxu0
    %v274 = vadd.f32 %v81, %v273
    %275 = vmatprep.mubr.bf16.mxu0 0
    %276 = vmatmul.mubr.bf16.gmra.mrb[0].mxu0 %v189
    %v277 = vpop.f32.mrb[0].mxu0
    %v278 = vadd.f32 %v77, %v277
    %v279 = vpop.f32.mrb[0].mxu0
    %v280 = vadd.f32 %v81, %v279
    %v281 = vpop.f32.mrb[0].mxu0
    %v282 = vadd.f32 %v77, %v281
    %v283 = vpop.f32.mrb[0].mxu0
    %v284 = vadd.f32 %v81, %v283
    %285 = vmatprep.mubr.bf16.mxu0 0
    %286 = vmatmul.mubr.bf16.gmra.mrb[0].mxu0 %v192
    %v287 = vpop.f32.mrb[0].mxu0
    %v288 = vadd.f32 %v77, %v287
    %v289 = vpop.f32.mrb[0].mxu0
    %v290 = vadd.f32 %v81, %v289
    %v291 = vpop.f32.mrb[0].mxu0
    %v292 = vadd.f32 %v77, %v291
    %v293 = vpop.f32.mrb[0].mxu0
    %v294 = vadd.f32 %v81, %v293
    %295 = vmatprep.mubr.bf16.mxu0 0
    %296 = vmatmul.mubr.bf16.gmra.mrb[0].mxu0 %v195
    %v297 = vpop.f32.mrb[0].mxu0
    %v298 = vadd.f32 %v77, %v297
    %v299 = vpop.f32.mrb[0].mxu0
    %v300 = vadd.f32 %v81, %v299
    %v301 = vpop.f32.mrb[0].mxu0
    %v302 = vadd.f32 %v77, %v301
    %v303 = vpop.f32.mrb[0].mxu0
    %v304 = vadd.f32 %v81, %v303
    %305 = vmatprep.mubr.bf16.mxu0 0
    %306 = vmatmul.mubr.bf16.gmra.mrb[0].mxu0 %v198
    %v307 = vpop.f32.mrb[0].mxu0
    %v308 = vadd.f32 %v77, %v307
    %v309 = vpop.f32.mrb[0].mxu0
    %v310 = vadd.f32 %v81, %v309
    %v311 = vpop.f32.mrb[0].mxu0
    %v312 = vadd.f32 %v77, %v311
    %v313 = vpop.f32.mrb[0].mxu0
    %v314 = vadd.f32 %v81, %v313
    %315 = vmatprep.mubr.bf16.mxu0 0
    %316 = vmatmul.mubr.bf16.gmra.mrb[0].mxu0 %v201
    %v317 = vpop.f32.mrb[0].mxu0
    %v318 = vadd.f32 %v77, %v317
    %v319 = vpop.f32.mrb[0].mxu0
    %v320 = vadd.f32 %v81, %v319
    %v321 = vpop.f32.mrb[0].mxu0
    %v322 = vadd.f32 %v77, %v321
    %v323 = vpop.f32.mrb[0].mxu0
    %v324 = vadd.f32 %v81, %v323
    %325 = vmatprep.mubr.bf16.mxu0 0
    %326 = vmatmul.mubr.bf16.gmra.mrb[0].mxu0 %v204
    %v327 = vpop.f32.mrb[0].mxu0
    %v328 = vadd.f32 %v77, %v327
    %v329 = vpop.f32.mrb[0].mxu0
    %v330 = vadd.f32 %v81, %v329
    %v331 = vpop.f32.mrb[0].mxu0
    %v332 = vadd.f32 %v77, %v331
    %v333 = vpop.f32.mrb[0].mxu0
    %v334 = vadd.f32 %v81, %v333
    %335 = vmatprep.mubr.bf16.mxu0 0
    %336 = vmatmul.mubr.bf16.gmra.mrb[0].mxu0 %v207
    %v337 = vpop.f32.mrb[0].mxu0
    %v338 = vadd.f32 %v77, %v337
    %v339 = vpop.f32.mrb[0].mxu0
    %v340 = vadd.f32 %v81, %v339
    %v341 = vpop.f32.mrb[0].mxu0
    %v342 = vadd.f32 %v77, %v341
    %v343 = vpop.f32.mrb[0].mxu0
    %v344 = vadd.f32 %v81, %v343
    %345 = vmatprep.mubr.bf16.mxu0 0
    %346 = vmatmul.mubr.bf16.gmra.mrb[0].mxu0 %v210
    %v347 = vpop.f32.mrb[0].mxu0
    %v348 = vadd.f32 %v77, %v347
    %v349 = vpop.f32.mrb[0].mxu0
    %v350 = vadd.f32 %v81, %v349
    %v351 = vpop.f32.mrb[0].mxu0
    %v352 = vadd.f32 %v77, %v351
    %v353 = vpop.f32.mrb[0].mxu0
    %v354 = vadd.f32 %v81, %v353
    %355 = vmatprep.mubr.bf16.mxu0 0
    %356 = vmatmul.mubr.bf16.gmra.mrb[0].mxu0 %v213
    %v357 = vpop.f32.mrb[0].mxu0
    %v358 = vadd.f32 %v77, %v357
    %v359 = vpop.f32.mrb[0].mxu0
    %v360 = vadd.f32 %v81, %v359
    %v361 = vpop.f32.mrb[0].mxu0
    %v362 = vadd.f32 %v77, %v361
    %v363 = vpop.f32.mrb[0].mxu0
    %v364 = vadd.f32 %v81, %v363
    %365 = vmatprep.mubr.bf16.mxu0 0
    %366 = vmatmul.mubr.bf16.gmra.mrb[0].mxu0 %v216
    %v367 = vpop.f32.mrb[0].mxu0
    %v368 = vadd.f32 %v77, %v367
    %v369 = vpop.f32.mrb[0].mxu0
    %v370 = vadd.f32 %v81, %v369
    %v371 = vpop.f32.mrb[0].mxu0
    %v372 = vadd.f32 %v77, %v371
    %v373 = vpop.f32.mrb[0].mxu0
    %v374 = vadd.f32 %v81, %v373
    %375 = vmatprep.mubr.bf16.mxu0 0
    %376 = vmatmul.mubr.bf16.gmra.mrb[0].mxu0 %v219
    %v377 = vpop.f32.mrb[0].mxu0
    %v378 = vadd.f32 %v77, %v377
    %v379 = vpop.f32.mrb[0].mxu0
    %v380 = vadd.f32 %v81, %v379
    %v381 = vpop.f32.mrb[0].mxu0
    %v382 = vadd.f32 %v77, %v381
    %v383 = vpop.f32.mrb[0].mxu0
    %v384 = vadd.f32 %v81, %v383
    %385 = vmatprep.mubr.bf16.mxu0 0
    %386 = vmatmul.mubr.bf16.gmra.mrb[0].mxu0 %v222
    %v387 = vpop.f32.mrb[0].mxu0
    %v388 = vadd.f32 %v77, %v387
    %v389 = vpop.f32.mrb[0].mxu0
    %v390 = vadd.f32 %v81, %v389
    %v391 = vpop.f32.mrb[0].mxu0
    %v392 = vadd.f32 %v77, %v391
    %v393 = vpop.f32.mrb[0].mxu0
    %v394 = vadd.f32 %v81, %v393
    %395 = vmatprep.mubr.bf16.mxu0 0
    %396 = vmatmul.mubr.bf16.gmra.mrb[0].mxu0 %v225
    %v397 = vpop.f32.mrb[0].mxu0
    %v398 = vadd.f32 %v77, %v397
    %v399 = vpop.f32.mrb[0].mxu0
    %v400 = vadd.f32 %v81, %v399
    %v401 = vpop.f32.mrb[0].mxu0
    %v402 = vadd.f32 %v77, %v401
    %v403 = vpop.f32.mrb[0].mxu0
    %v404 = vadd.f32 %v81, %v403
    %405 = vmatprep.mubr.bf16.mxu0 0
    %406 = vmatmul.mubr.bf16.gmra.mrb[0].mxu0 %v228
    %v407 = vpop.f32.mrb[0].mxu0
    %v408 = vadd.f32 %v77, %v407
    %v409 = vpop.f32.mrb[0].mxu0
    %v410 = vadd.f32 %v81, %v409
    %v411 = vpop.f32.mrb[0].mxu0
    %v412 = vadd.f32 %v77, %v411
    %v413 = vpop.f32.mrb[0].mxu0
    %v414 = vadd.f32 %v81, %v413
    %415 = vmatprep.mubr.bf16.mxu0 0
    %416 = vmatmul.mubr.bf16.gmra.mrb[0].mxu0 %v231
    %v417 = vpop.f32.mrb[0].mxu0
    %v418 = vadd.f32 %v77, %v417
    %v419 = vpop.f32.mrb[0].mxu0
    %v420 = vadd.f32 %v81, %v419
    %v421 = vpop.f32.mrb[0].mxu0
    %v422 = vadd.f32 %v77, %v421
    %v423 = vpop.f32.mrb[0].mxu0
    %v424 = vadd.f32 %v81, %v423
    %425 = vdwg.mxu0
    %v426 = vmax.f32 %v268, 0.0
    %v427 = vmax.f32 %v270, 0.0
    %v428 = vmax.f32 %v272, 0.0
    %v429 = vmax.f32 %v274, 0.0
    %v430 = vmax.f32 %v278, 0.0
    %v431 = vmax.f32 %v280, 0.0
    %v432 = vmax.f32 %v282, 0.0
    %v433 = vmax.f32 %v284, 0.0
    %v434 = vmax.f32 %v288, 0.0
    %v435 = vmax.f32 %v290, 0.0
    %v436 = vmax.f32 %v292, 0.0
    %v437 = vmax.f32 %v294, 0.0
    %v438 = vmax.f32 %v298, 0.0
    %v439 = vmax.f32 %v300, 0.0
    %v440 = vmax.f32 %v302, 0.0
    %v441 = vmax.f32 %v304, 0.0
    %v442 = vmax.f32 %v308, 0.0
    %v443 = vmax.f32 %v310, 0.0
    %v444 = vmax.f32 %v312, 0.0
    %v445 = vmax.f32 %v314, 0.0
    %v446 = vmax.f32 %v318, 0.0
    %v447 = vmax.f32 %v320, 0.0
    %v448 = vmax.f32 %v322, 0.0
    %v449 = vmax.f32 %v324, 0.0
    %v450 = vmax.f32 %v328, 0.0
    %v451 = vmax.f32 %v330, 0.0
    %v452 = vmax.f32 %v332, 0.0
    %v453 = vmax.f32 %v334, 0.0
    %v454 = vmax.f32 %v338, 0.0
    %v455 = vmax.f32 %v340, 0.0
    %v456 = vmax.f32 %v342, 0.0
    %v457 = vmax.f32 %v344, 0.0
    %v458 = vmax.f32 %v348, 0.0
    %v459 = vmax.f32 %v350, 0.0
    %v460 = vmax.f32 %v352, 0.0
    %v461 = vmax.f32 %v354, 0.0
    %v462 = vmax.f32 %v358, 0.0
    %v463 = vmax.f32 %v360, 0.0
    %v464 = vmax.f32 %v362, 0.0
    %v465 = vmax.f32 %v364, 0.0
    %v466 = vmax.f32 %v368, 0.0
    %v467 = vmax.f32 %v370, 0.0
    %v468 = vmax.f32 %v372, 0.0
    %v469 = vmax.f32 %v374, 0.0
    %v470 = vmax.f32 %v378, 0.0
    %v471 = vmax.f32 %v380, 0.0
    %v472 = vmax.f32 %v382, 0.0
    %v473 = vmax.f32 %v384, 0.0
    %v474 = vmax.f32 %v388, 0.0
    %v475 = vmax.f32 %v390, 0.0
    %v476 = vmax.f32 %v392, 0.0
    %v477 = vmax.f32 %v394, 0.0
    %v478 = vmax.f32 %v398, 0.0
    %v479 = vmax.f32 %v400, 0.0
    %v480 = vmax.f32 %v402, 0.0
    %v481 = vmax.f32 %v404, 0.0
    %v482 = vmax.f32 %v408, 0.0
    %v483 = vmax.f32 %v410, 0.0
    %v484 = vmax.f32 %v412, 0.0
    %v485 = vmax.f32 %v414, 0.0
    %v486 = vmax.f32 %v418, 0.0
    %v487 = vmax.f32 %v420, 0.0
    %v488 = vmax.f32 %v422, 0.0
    %v489 = vmax.f32 %v424, 0.0
    %v490 = vpack.c.bf16 %v428, %v426
    %v491 = vpack.c.bf16 %v429, %v427
    %v492 = vpack.c.bf16 %v432, %v430
    %v493 = vpack.c.bf16 %v433, %v431
    %v494 = vpack.c.bf16 %v436, %v434
    %v495 = vpack.c.bf16 %v437, %v435
    %v496 = vpack.c.bf16 %v440, %v438
    %v497 = vpack.c.bf16 %v441, %v439
    %v498 = vpack.c.bf16 %v444, %v442
    %v499 = vpack.c.bf16 %v445, %v443
    %v500 = vpack.c.bf16 %v448, %v446
    %v501 = vpack.c.bf16 %v449, %v447
    %v502 = vpack.c.bf16 %v452, %v450
    %v503 = vpack.c.bf16 %v453, %v451
    %v504 = vpack.c.bf16 %v456, %v454
    %v505 = vpack.c.bf16 %v457, %v455
    %v506 = vpack.c.bf16 %v460, %v458
    %v507 = vpack.c.bf16 %v461, %v459
    %v508 = vpack.c.bf16 %v464, %v462
    %v509 = vpack.c.bf16 %v465, %v463
    %v510 = vpack.c.bf16 %v468, %v466
    %v511 = vpack.c.bf16 %v469, %v467
    %v512 = vpack.c.bf16 %v472, %v470
    %v513 = vpack.c.bf16 %v473, %v471
    %v514 = vpack.c.bf16 %v476, %v474
    %v515 = vpack.c.bf16 %v477, %v475
    %v516 = vpack.c.bf16 %v480, %v478
    %v517 = vpack.c.bf16 %v481, %v479
    %v518 = vpack.c.bf16 %v484, %v482
    %v519 = vpack.c.bf16 %v485, %v483
    %v520 = vpack.c.bf16 %v488, %v486
    %v521 = vpack.c.bf16 %v489, %v487
    %v522 = vld [vmem:[%s3] sm:$0xf]
    %v523 = vld [vmem:[%s3 + $0x4] sm:$0xf]
    %v524 = vld [vmem:[%s3 + $0x8] sm:$0xf]
    %v525 = vld [vmem:[%s3 + $0xc] sm:$0xf]
    %v526 = vld [vmem:[%s3 + $0x10] sm:$0xf]
    %v527 = vld [vmem:[%s3 + $0x14] sm:$0xf]
    %v528 = vld [vmem:[%s3 + $0x18] sm:$0xf]
    %v529 = vld [vmem:[%s3 + $0x1c] sm:$0xf]
    %v530 = vld [vmem:[%s3 + $0x20] sm:$0xf]
    %v531 = vld [vmem:[%s3 + $0x24] sm:$0xf]
    %v532 = vld [vmem:[%s3 + $0x28] sm:$0xf]
    %v533 = vld [vmem:[%s3 + $0x2c] sm:$0xf]
    %v534 = vld [vmem:[%s3 + $0x30] sm:$0xf]
    %v535 = vld [vmem:[%s3 + $0x34] sm:$0xf]
    %v536 = vld [vmem:[%s3 + $0x38] sm:$0xf]
    %v537 = vld [vmem:[%s3 + $0x3c] sm:$0xf]
    %v538 = vld [vmem:[%s3 + $0x40] sm:$0xf]
    %v539 = vld [vmem:[%s3 + $0x44] sm:$0xf]
    %v540 = vld [vmem:[%s3 + $0x48] sm:$0xf]
    %v541 = vld [vmem:[%s3 + $0x4c] sm:$0xf]
    %v542 = vld [vmem:[%s3 + $0x50] sm:$0xf]
    %v543 = vld [vmem:[%s3 + $0x54] sm:$0xf]
    %v544 = vld [vmem:[%s3 + $0x58] sm:$0xf]
    %v545 = vld [vmem:[%s3 + $0x5c] sm:$0xf]
    %v546 = vld [vmem:[%s3 + $0x60] sm:$0xf]
    %v547 = vld [vmem:[%s3 + $0x64] sm:$0xf]
    %v548 = vld [vmem:[%s3 + $0x68] sm:$0xf]
    %v549 = vld [vmem:[%s3 + $0x6c] sm:$0xf]
    %v550 = vld [vmem:[%s3 + $0x70] sm:$0xf]
    %v551 = vld [vmem:[%s3 + $0x74] sm:$0xf]
    %v552 = vld [vmem:[%s3 + $0x78] sm:$0xf]
    %v553 = vld [vmem:[%s3 + $0x7c] sm:$0xf]
    %v554 = vld [vmem:[%s4] sm:$0x1]
    %v556 = vlaneseq
    %v557 = vshrl.u32 %v556, 7
    %v558 = vsub.s32 0, %v557
    %v559 = vrot.slane %v554, %v558
    %v593 = vunpack.c.l.b16 %v522
    %v594 = vunpack.c.l.b16 %v523
    %v595 = vunpack.c.l.b16 %v524
    %v596 = vunpack.c.l.b16 %v525
    %v597 = vunpack.c.l.b16 %v526
    %v598 = vunpack.c.l.b16 %v527
    %v599 = vunpack.c.l.b16 %v528
    %v600 = vunpack.c.l.b16 %v529
    %v601 = vunpack.c.l.b16 %v530
    %v602 = vunpack.c.l.b16 %v531
    %v603 = vunpack.c.l.b16 %v532
    %v604 = vunpack.c.l.b16 %v533
    %v605 = vunpack.c.l.b16 %v534
    %v606 = vunpack.c.l.b16 %v535
    %v607 = vunpack.c.l.b16 %v536
    %v608 = vunpack.c.l.b16 %v537
    %v609 = vunpack.c.l.b16 %v538
    %v610 = vunpack.c.l.b16 %v539
    %v611 = vunpack.c.l.b16 %v540
    %v612 = vunpack.c.l.b16 %v541
    %v613 = vunpack.c.l.b16 %v542
    %v614 = vunpack.c.l.b16 %v543
    %v615 = vunpack.c.l.b16 %v544
    %v616 = vunpack.c.l.b16 %v545
    %v617 = vunpack.c.l.b16 %v546
    %v618 = vunpack.c.l.b16 %v547
    %v619 = vunpack.c.l.b16 %v548
    %v620 = vunpack.c.l.b16 %v549
    %v621 = vunpack.c.l.b16 %v550
    %v622 = vunpack.c.l.b16 %v551
    %v623 = vunpack.c.l.b16 %v552
    %v624 = vunpack.c.l.b16 %v553
    %v625 = vpack.c.b16 %v594, %v593
    %v626 = vpack.c.b16 %v596, %v595
    %v627 = vpack.c.b16 %v598, %v597
    %v628 = vpack.c.b16 %v600, %v599
    %v629 = vpack.c.b16 %v602, %v601
    %v630 = vpack.c.b16 %v604, %v603
    %v631 = vpack.c.b16 %v606, %v605
    %v632 = vpack.c.b16 %v608, %v607
    %v633 = vpack.c.b16 %v610, %v609
    %v634 = vpack.c.b16 %v612, %v611
    %v635 = vpack.c.b16 %v614, %v613
    %v636 = vpack.c.b16 %v616, %v615
    %v637 = vpack.c.b16 %v618, %v617
    %v638 = vpack.c.b16 %v620, %v619
    %v639 = vpack.c.b16 %v622, %v621
    %v640 = vpack.c.b16 %v624, %v623
    %657 = vmatprep.subr.bf16.mxu0 0
    %658 = vmatpush1.bf16.msra.mxu0 %v625
    %659 = vmatprep.subr.bf16.mxu0 0
    %660 = vmatpush1.bf16.msra.mxu0 %v626
    %661 = vmatprep.subr.bf16.mxu0 0
    %662 = vmatpush1.bf16.msra.mxu0 %v627
    %663 = vmatprep.subr.bf16.mxu0 0
    %664 = vmatpush1.bf16.msra.mxu0 %v628
    %665 = vmatprep.subr.bf16.mxu0 0
    %666 = vmatpush1.bf16.msra.mxu0 %v629
    %667 = vmatprep.subr.bf16.mxu0 0
    %668 = vmatpush1.bf16.msra.mxu0 %v630
    %669 = vmatprep.subr.bf16.mxu0 0
    %670 = vmatpush1.bf16.msra.mxu0 %v631
    %671 = vmatprep.subr.bf16.mxu0 0
    %672 = vmatpush1.bf16.msra.mxu0 %v632
    %673 = vmatprep.subr.bf16.mxu0 0
    %674 = vmatpush1.bf16.msra.mxu0 %v633
    %675 = vmatprep.subr.bf16.mxu0 0
    %676 = vmatpush1.bf16.msra.mxu0 %v634
    %677 = vmatprep.subr.bf16.mxu0 0
    %678 = vmatpush1.bf16.msra.mxu0 %v635
    %679 = vmatprep.subr.bf16.mxu0 0
    %680 = vmatpush1.bf16.msra.mxu0 %v636
    %681 = vmatprep.subr.bf16.mxu0 0
    %682 = vmatpush1.bf16.msra.mxu0 %v637
    %683 = vmatprep.subr.bf16.mxu0 0
    %684 = vmatpush1.bf16.msra.mxu0 %v638
    %685 = vmatprep.subr.bf16.mxu0 0
    %686 = vmatpush1.bf16.msra.mxu0 %v639
    %687 = vmatprep.subr.bf16.mxu0 0
    %688 = vmatpush1.bf16.msra.mxu0 %v640
    %689 = vmatprep.mubr.bf16.mxu0 %v491
    %690 = vmatmul.mubr.bf16.gmra.mrb[0].mxu0 %v490
    %v691 = vpop.f32.mrb[0].mxu0
    %v692 = vadd.f32 %v559, %v691
    %v693 = vpop.f32.mrb[0].mxu0
    %v694 = vpop.f32.mrb[0].mxu0
    %v695 = vadd.f32 %v559, %v694
    %v696 = vpop.f32.mrb[0].mxu0
    %697 = vmatprep.mubr.bf16.mxu0 %v493
    %698 = vmatmul.mubr.bf16.gmra.mrb[0].mxu0 %v492
    %v699 = vpop.f32.mrb[0].mxu0
    %v700 = vadd.f32 %v559, %v699
    %v701 = vpop.f32.mrb[0].mxu0
    %v702 = vpop.f32.mrb[0].mxu0
    %v703 = vadd.f32 %v559, %v702
    %v704 = vpop.f32.mrb[0].mxu0
    %705 = vmatprep.mubr.bf16.mxu0 %v495
    %706 = vmatmul.mubr.bf16.gmra.mrb[0].mxu0 %v494
    %v707 = vpop.f32.mrb[0].mxu0
    %v708 = vadd.f32 %v559, %v707
    %v709 = vpop.f32.mrb[0].mxu0
    %v710 = vpop.f32.mrb[0].mxu0
    %v711 = vadd.f32 %v559, %v710
    %v712 = vpop.f32.mrb[0].mxu0
    %713 = vmatprep.mubr.bf16.mxu0 %v497
    %714 = vmatmul.mubr.bf16.gmra.mrb[0].mxu0 %v496
    %v715 = vpop.f32.mrb[0].mxu0
    %v716 = vadd.f32 %v559, %v715
    %v717 = vpop.f32.mrb[0].mxu0
    %v718 = vpop.f32.mrb[0].mxu0
    %v719 = vadd.f32 %v559, %v718
    %v720 = vpop.f32.mrb[0].mxu0
    %721 = vmatprep.mubr.bf16.mxu0 %v499
    %722 = vmatmul.mubr.bf16.gmra.mrb[0].mxu0 %v498
    %v723 = vpop.f32.mrb[0].mxu0
    %v724 = vadd.f32 %v559, %v723
    %v725 = vpop.f32.mrb[0].mxu0
    %v726 = vpop.f32.mrb[0].mxu0
    %v727 = vadd.f32 %v559, %v726
    %v728 = vpop.f32.mrb[0].mxu0
    %729 = vmatprep.mubr.bf16.mxu0 %v501
    %730 = vmatmul.mubr.bf16.gmra.mrb[0].mxu0 %v500
    %v731 = vpop.f32.mrb[0].mxu0
    %v732 = vadd.f32 %v559, %v731
    %v733 = vpop.f32.mrb[0].mxu0
    %v734 = vpop.f32.mrb[0].mxu0
    %v735 = vadd.f32 %v559, %v734
    %v736 = vpop.f32.mrb[0].mxu0
    %737 = vmatprep.mubr.bf16.mxu0 %v503
    %738 = vmatmul.mubr.bf16.gmra.mrb[0].mxu0 %v502
    %v739 = vpop.f32.mrb[0].mxu0
    %v740 = vadd.f32 %v559, %v739
    %v741 = vpop.f32.mrb[0].mxu0
    %v742 = vpop.f32.mrb[0].mxu0
    %v743 = vadd.f32 %v559, %v742
    %v744 = vpop.f32.mrb[0].mxu0
    %745 = vmatprep.mubr.bf16.mxu0 %v505
    %746 = vmatmul.mubr.bf16.gmra.mrb[0].mxu0 %v504
    %v747 = vpop.f32.mrb[0].mxu0
    %v748 = vadd.f32 %v559, %v747
    %v749 = vpop.f32.mrb[0].mxu0
    %v750 = vpop.f32.mrb[0].mxu0
    %v751 = vadd.f32 %v559, %v750
    %v752 = vpop.f32.mrb[0].mxu0
    %753 = vmatprep.mubr.bf16.mxu0 %v507
    %754 = vmatmul.mubr.bf16.gmra.mrb[0].mxu0 %v506
    %v755 = vpop.f32.mrb[0].mxu0
    %v756 = vadd.f32 %v559, %v755
    %v757 = vpop.f32.mrb[0].mxu0
    %v758 = vpop.f32.mrb[0].mxu0
    %v759 = vadd.f32 %v559, %v758
    %v760 = vpop.f32.mrb[0].mxu0
    %761 = vmatprep.mubr.bf16.mxu0 %v509
    %762 = vmatmul.mubr.bf16.gmra.mrb[0].mxu0 %v508
    %v763 = vpop.f32.mrb[0].mxu0
    %v764 = vadd.f32 %v559, %v763
    %v765 = vpop.f32.mrb[0].mxu0
    %v766 = vpop.f32.mrb[0].mxu0
    %v767 = vadd.f32 %v559, %v766
    %v768 = vpop.f32.mrb[0].mxu0
    %769 = vmatprep.mubr.bf16.mxu0 %v511
    %770 = vmatmul.mubr.bf16.gmra.mrb[0].mxu0 %v510
    %v771 = vpop.f32.mrb[0].mxu0
    %v772 = vadd.f32 %v559, %v771
    %v773 = vpop.f32.mrb[0].mxu0
    %v774 = vpop.f32.mrb[0].mxu0
    %v775 = vadd.f32 %v559, %v774
    %v776 = vpop.f32.mrb[0].mxu0
    %777 = vmatprep.mubr.bf16.mxu0 %v513
    %778 = vmatmul.mubr.bf16.gmra.mrb[0].mxu0 %v512
    %v779 = vpop.f32.mrb[0].mxu0
    %v780 = vadd.f32 %v559, %v779
    %v781 = vpop.f32.mrb[0].mxu0
    %v782 = vpop.f32.mrb[0].mxu0
    %v783 = vadd.f32 %v559, %v782
    %v784 = vpop.f32.mrb[0].mxu0
    %785 = vmatprep.mubr.bf16.mxu0 %v515
    %786 = vmatmul.mubr.bf16.gmra.mrb[0].mxu0 %v514
    %v787 = vpop.f32.mrb[0].mxu0
    %v788 = vadd.f32 %v559, %v787
    %v789 = vpop.f32.mrb[0].mxu0
    %v790 = vpop.f32.mrb[0].mxu0
    %v791 = vadd.f32 %v559, %v790
    %v792 = vpop.f32.mrb[0].mxu0
    %793 = vmatprep.mubr.bf16.mxu0 %v517
    %794 = vmatmul.mubr.bf16.gmra.mrb[0].mxu0 %v516
    %v795 = vpop.f32.mrb[0].mxu0
    %v796 = vadd.f32 %v559, %v795
    %v797 = vpop.f32.mrb[0].mxu0
    %v798 = vpop.f32.mrb[0].mxu0
    %v799 = vadd.f32 %v559, %v798
    %v800 = vpop.f32.mrb[0].mxu0
    %801 = vmatprep.mubr.bf16.mxu0 %v519
    %802 = vmatmul.mubr.bf16.gmra.mrb[0].mxu0 %v518
    %v803 = vpop.f32.mrb[0].mxu0
    %v804 = vadd.f32 %v559, %v803
    %v805 = vpop.f32.mrb[0].mxu0
    %v806 = vpop.f32.mrb[0].mxu0
    %v807 = vadd.f32 %v559, %v806
    %v808 = vpop.f32.mrb[0].mxu0
    %809 = vmatprep.mubr.bf16.mxu0 %v521
    %810 = vmatmul.mubr.bf16.gmra.mrb[0].mxu0 %v520
    %v811 = vpop.f32.mrb[0].mxu0
    %v812 = vadd.f32 %v559, %v811
    %v813 = vpop.f32.mrb[0].mxu0
    %v814 = vpop.f32.mrb[0].mxu0
    %v815 = vadd.f32 %v559, %v814
    %v816 = vpop.f32.mrb[0].mxu0
    %817 = vdwg.mxu0
    %v818 = vmax.f32 %v692, 0.0
    %v819 = vmax.f32 %v695, 0.0
    %v820 = vmax.f32 %v700, 0.0
    %v821 = vmax.f32 %v703, 0.0
    %v822 = vmax.f32 %v708, 0.0
    %v823 = vmax.f32 %v711, 0.0
    %v824 = vmax.f32 %v716, 0.0
    %v825 = vmax.f32 %v719, 0.0
    %v826 = vmax.f32 %v724, 0.0
    %v827 = vmax.f32 %v727, 0.0
    %v828 = vmax.f32 %v732, 0.0
    %v829 = vmax.f32 %v735, 0.0
    %v830 = vmax.f32 %v740, 0.0
    %v831 = vmax.f32 %v743, 0.0
    %v832 = vmax.f32 %v748, 0.0
    %v833 = vmax.f32 %v751, 0.0
    %v834 = vmax.f32 %v756, 0.0
    %v835 = vmax.f32 %v759, 0.0
    %v836 = vmax.f32 %v764, 0.0
    %v837 = vmax.f32 %v767, 0.0
    %v838 = vmax.f32 %v772, 0.0
    %v839 = vmax.f32 %v775, 0.0
    %v840 = vmax.f32 %v780, 0.0
    %v841 = vmax.f32 %v783, 0.0
    %v842 = vmax.f32 %v788, 0.0
    %v843 = vmax.f32 %v791, 0.0
    %v844 = vmax.f32 %v796, 0.0
    %v845 = vmax.f32 %v799, 0.0
    %v846 = vmax.f32 %v804, 0.0
    %v847 = vmax.f32 %v807, 0.0
    %v848 = vmax.f32 %v812, 0.0
    %v849 = vmax.f32 %v815, 0.0
    %v850 = vpack.c.bf16 %v819, %v818
    %v851 = vpack.c.bf16 %v821, %v820
    %v852 = vpack.c.bf16 %v823, %v822
    %v853 = vpack.c.bf16 %v825, %v824
    %v854 = vpack.c.bf16 %v827, %v826
    %v855 = vpack.c.bf16 %v829, %v828
    %v856 = vpack.c.bf16 %v831, %v830
    %v857 = vpack.c.bf16 %v833, %v832
    %v858 = vpack.c.bf16 %v835, %v834
    %v859 = vpack.c.bf16 %v837, %v836
    %v860 = vpack.c.bf16 %v839, %v838
    %v861 = vpack.c.bf16 %v841, %v840
    %v862 = vpack.c.bf16 %v843, %v842
    %v863 = vpack.c.bf16 %v845, %v844
    %v864 = vpack.c.bf16 %v847, %v846
    %v865 = vpack.c.bf16 %v849, %v848
    %v866 = vld [vmem:[%s5] sm:$0xf]
    %v867 = vld [vmem:[%s5 + $0x4] sm:$0xf]
    %v868 = vld [vmem:[%s5 + $0x8] sm:$0xf]
    %v869 = vld [vmem:[%s5 + $0xc] sm:$0xf]
    %v870 = vld [vmem:[%s5 + $0x10] sm:$0xf]
    %v871 = vld [vmem:[%s5 + $0x14] sm:$0xf]
    %v872 = vld [vmem:[%s5 + $0x18] sm:$0xf]
    %v873 = vld [vmem:[%s5 + $0x1c] sm:$0xf]
    %v874 = vld [vmem:[%s5 + $0x20] sm:$0xf]
    %v875 = vld [vmem:[%s5 + $0x24] sm:$0xf]
    %v876 = vld [vmem:[%s5 + $0x28] sm:$0xf]
    %v877 = vld [vmem:[%s5 + $0x2c] sm:$0xf]
    %v878 = vld [vmem:[%s5 + $0x30] sm:$0xf]
    %v879 = vld [vmem:[%s5 + $0x34] sm:$0xf]
    %v880 = vld [vmem:[%s5 + $0x38] sm:$0xf]
    %v881 = vld [vmem:[%s5 + $0x3c] sm:$0xf]
    %v882 = vld [vmem:[%s6] sm:$0x1]
    %v884 = vlaneseq
    %v885 = vshrl.u32 %v884, 7
    %v886 = vsub.s32 0, %v885
    %v887 = vrot.slane %v882, %v886
    %v905 = vunpack.c.l.b16 %v866
    %v906 = vunpack.c.l.b16 %v867
    %v907 = vunpack.c.l.b16 %v868
    %v908 = vunpack.c.l.b16 %v869
    %v909 = vunpack.c.l.b16 %v870
    %v910 = vunpack.c.l.b16 %v871
    %v911 = vunpack.c.l.b16 %v872
    %v912 = vunpack.c.l.b16 %v873
    %v913 = vunpack.c.l.b16 %v874
    %v914 = vunpack.c.l.b16 %v875
    %v915 = vunpack.c.l.b16 %v876
    %v916 = vunpack.c.l.b16 %v877
    %v917 = vunpack.c.l.b16 %v878
    %v918 = vunpack.c.l.b16 %v879
    %v919 = vunpack.c.l.b16 %v880
    %v920 = vunpack.c.l.b16 %v881
    %v921 = vpack.c.b16 %v906, %v905
    %v922 = vpack.c.b16 %v908, %v907
    %v923 = vpack.c.b16 %v910, %v909
    %v924 = vpack.c.b16 %v912, %v911
    %v925 = vpack.c.b16 %v914, %v913
    %v926 = vpack.c.b16 %v916, %v915
    %v927 = vpack.c.b16 %v918, %v917
    %v928 = vpack.c.b16 %v920, %v919
    %937 = vmatprep.subr.bf16.mxu0 0
    %938 = vmatpush1.bf16.msra.mxu0 %v921
    %939 = vmatprep.subr.bf16.mxu0 0
    %940 = vmatpush1.bf16.msra.mxu0 %v922
    %941 = vmatprep.subr.bf16.mxu0 0
    %942 = vmatpush1.bf16.msra.mxu0 %v923
    %943 = vmatprep.subr.bf16.mxu0 0
    %944 = vmatpush1.bf16.msra.mxu0 %v924
    %945 = vmatprep.subr.bf16.mxu0 0
    %946 = vmatpush1.bf16.msra.mxu0 %v925
    %947 = vmatprep.subr.bf16.mxu0 0
    %948 = vmatpush1.bf16.msra.mxu0 %v926
    %949 = vmatprep.subr.bf16.mxu0 0
    %950 = vmatpush1.bf16.msra.mxu0 %v927
    %951 = vmatprep.subr.bf16.mxu0 0
    %952 = vmatpush1.bf16.msra.mxu0 %v928
    %953 = vmatprep.subr.bf16.mxu0 0
    %954 = vmatpush1.bf16.msra.mxu0 0
    %955 = vmatprep.subr.bf16.mxu0 0
    %956 = vmatpush1.bf16.msra.mxu0 0
    %957 = vmatprep.subr.bf16.mxu0 0
    %958 = vmatpush1.bf16.msra.mxu0 0
    %959 = vmatprep.subr.bf16.mxu0 0
    %960 = vmatpush1.bf16.msra.mxu0 0
    %961 = vmatprep.subr.bf16.mxu0 0
    %962 = vmatpush1.bf16.msra.mxu0 0
    %963 = vmatprep.subr.bf16.mxu0 0
    %964 = vmatpush1.bf16.msra.mxu0 0
    %965 = vmatprep.subr.bf16.mxu0 0
    %966 = vmatpush1.bf16.msra.mxu0 0
    %967 = vmatprep.subr.bf16.mxu0 0
    %968 = vmatpush1.bf16.msra.mxu0 0
    %969 = vmatprep.mubr.bf16.mxu0 0
    %970 = vmatmul.mubr.bf16.gmra.mrb[0].mxu0 %v850
    %v971 = vpop.f32.mrb[0].mxu0
    %v972 = vadd.f32 %v887, %v971
    %v973 = vpop.f32.mrb[0].mxu0
    %v974 = vpop.f32.mrb[0].mxu0
    %v975 = vadd.f32 %v887, %v974
    %v976 = vpop.f32.mrb[0].mxu0
    %977 = vmatprep.mubr.bf16.mxu0 0
    %978 = vmatmul.mubr.bf16.gmra.mrb[0].mxu0 %v851
    %v979 = vpop.f32.mrb[0].mxu0
    %v980 = vadd.f32 %v887, %v979
    %v981 = vpop.f32.mrb[0].mxu0
    %v982 = vpop.f32.mrb[0].mxu0
    %v983 = vadd.f32 %v887, %v982
    %v984 = vpop.f32.mrb[0].mxu0
    %985 = vmatprep.mubr.bf16.mxu0 0
    %986 = vmatmul.mubr.bf16.gmra.mrb[0].mxu0 %v852
    %v987 = vpop.f32.mrb[0].mxu0
    %v988 = vadd.f32 %v887, %v987
    %v989 = vpop.f32.mrb[0].mxu0
    %v990 = vpop.f32.mrb[0].mxu0
    %v991 = vadd.f32 %v887, %v990
    %v992 = vpop.f32.mrb[0].mxu0
    %993 = vmatprep.mubr.bf16.mxu0 0
    %994 = vmatmul.mubr.bf16.gmra.mrb[0].mxu0 %v853
    %v995 = vpop.f32.mrb[0].mxu0
    %v996 = vadd.f32 %v887, %v995
    %v997 = vpop.f32.mrb[0].mxu0
    %v998 = vpop.f32.mrb[0].mxu0
    %v999 = vadd.f32 %v887, %v998
    %v1000 = vpop.f32.mrb[0].mxu0
    %1001 = vmatprep.mubr.bf16.mxu0 0
    %1002 = vmatmul.mubr.bf16.gmra.mrb[0].mxu0 %v854
    %v1003 = vpop.f32.mrb[0].mxu0
    %v1004 = vadd.f32 %v887, %v1003
    %v1005 = vpop.f32.mrb[0].mxu0
    %v1006 = vpop.f32.mrb[0].mxu0
    %v1007 = vadd.f32 %v887, %v1006
    %v1008 = vpop.f32.mrb[0].mxu0
    %1009 = vmatprep.mubr.bf16.mxu0 0
    %1010 = vmatmul.mubr.bf16.gmra.mrb[0].mxu0 %v855
    %v1011 = vpop.f32.mrb[0].mxu0
    %v1012 = vadd.f32 %v887, %v1011
    %v1013 = vpop.f32.mrb[0].mxu0
    %v1014 = vpop.f32.mrb[0].mxu0
    %v1015 = vadd.f32 %v887, %v1014
    %v1016 = vpop.f32.mrb[0].mxu0
    %1017 = vmatprep.mubr.bf16.mxu0 0
    %1018 = vmatmul.mubr.bf16.gmra.mrb[0].mxu0 %v856
    %v1019 = vpop.f32.mrb[0].mxu0
    %v1020 = vadd.f32 %v887, %v1019
    %v1021 = vpop.f32.mrb[0].mxu0
    %v1022 = vpop.f32.mrb[0].mxu0
    %v1023 = vadd.f32 %v887, %v1022
    %v1024 = vpop.f32.mrb[0].mxu0
    %1025 = vmatprep.mubr.bf16.mxu0 0
    %1026 = vmatmul.mubr.bf16.gmra.mrb[0].mxu0 %v857
    %v1027 = vpop.f32.mrb[0].mxu0
    %v1028 = vadd.f32 %v887, %v1027
    %v1029 = vpop.f32.mrb[0].mxu0
    %v1030 = vpop.f32.mrb[0].mxu0
    %v1031 = vadd.f32 %v887, %v1030
    %v1032 = vpop.f32.mrb[0].mxu0
    %1033 = vmatprep.mubr.bf16.mxu0 0
    %1034 = vmatmul.mubr.bf16.gmra.mrb[0].mxu0 %v858
    %v1035 = vpop.f32.mrb[0].mxu0
    %v1036 = vadd.f32 %v887, %v1035
    %v1037 = vpop.f32.mrb[0].mxu0
    %v1038 = vpop.f32.mrb[0].mxu0
    %v1039 = vadd.f32 %v887, %v1038
    %v1040 = vpop.f32.mrb[0].mxu0
    %1041 = vmatprep.mubr.bf16.mxu0 0
    %1042 = vmatmul.mubr.bf16.gmra.mrb[0].mxu0 %v859
    %v1043 = vpop.f32.mrb[0].mxu0
    %v1044 = vadd.f32 %v887, %v1043
    %v1045 = vpop.f32.mrb[0].mxu0
    %v1046 = vpop.f32.mrb[0].mxu0
    %v1047 = vadd.f32 %v887, %v1046
    %v1048 = vpop.f32.mrb[0].mxu0
    %1049 = vmatprep.mubr.bf16.mxu0 0
    %1050 = vmatmul.mubr.bf16.gmra.mrb[0].mxu0 %v860
    %v1051 = vpop.f32.mrb[0].mxu0
    %v1052 = vadd.f32 %v887, %v1051
    %v1053 = vpop.f32.mrb[0].mxu0
    %v1054 = vpop.f32.mrb[0].mxu0
    %v1055 = vadd.f32 %v887, %v1054
    %v1056 = vpop.f32.mrb[0].mxu0
    %1057 = vmatprep.mubr.bf16.mxu0 0
    %1058 = vmatmul.mubr.bf16.gmra.mrb[0].mxu0 %v861
    %v1059 = vpop.f32.mrb[0].mxu0
    %v1060 = vadd.f32 %v887, %v1059
    %v1061 = vpop.f32.mrb[0].mxu0
    %v1062 = vpop.f32.mrb[0].mxu0
    %v1063 = vadd.f32 %v887, %v1062
    %v1064 = vpop.f32.mrb[0].mxu0
    %1065 = vmatprep.mubr.bf16.mxu0 0
    %1066 = vmatmul.mubr.bf16.gmra.mrb[0].mxu0 %v862
    %v1067 = vpop.f32.mrb[0].mxu0
    %v1068 = vadd.f32 %v887, %v1067
    %v1069 = vpop.f32.mrb[0].mxu0
    %v1070 = vpop.f32.mrb[0].mxu0
    %v1071 = vadd.f32 %v887, %v1070
    %v1072 = vpop.f32.mrb[0].mxu0
    %1073 = vmatprep.mubr.bf16.mxu0 0
    %1074 = vmatmul.mubr.bf16.gmra.mrb[0].mxu0 %v863
    %v1075 = vpop.f32.mrb[0].mxu0
    %v1076 = vadd.f32 %v887, %v1075
    %v1077 = vpop.f32.mrb[0].mxu0
    %v1078 = vpop.f32.mrb[0].mxu0
    %v1079 = vadd.f32 %v887, %v1078
    %v1080 = vpop.f32.mrb[0].mxu0
    %1081 = vmatprep.mubr.bf16.mxu0 0
    %1082 = vmatmul.mubr.bf16.gmra.mrb[0].mxu0 %v864
    %v1083 = vpop.f32.mrb[0].mxu0
    %v1084 = vadd.f32 %v887, %v1083
    %v1085 = vpop.f32.mrb[0].mxu0
    %v1086 = vpop.f32.mrb[0].mxu0
    %v1087 = vadd.f32 %v887, %v1086
    %v1088 = vpop.f32.mrb[0].mxu0
    %1089 = vmatprep.mubr.bf16.mxu0 0
    %1090 = vmatmul.mubr.bf16.gmra.mrb[0].mxu0 %v865
    %v1091 = vpop.f32.mrb[0].mxu0
    %v1092 = vadd.f32 %v887, %v1091
    %v1093 = vpop.f32.mrb[0].mxu0
    %v1094 = vpop.f32.mrb[0].mxu0
    %v1095 = vadd.f32 %v887, %v1094
    %v1096 = vpop.f32.mrb[0].mxu0
    %1097 = vdwg.mxu0
    %v1098 = vmax.f32 %v972, 0.0
    %v1099 = vmax.f32 %v975, 0.0
    %v1100 = vmax.f32 %v980, 0.0
    %v1101 = vmax.f32 %v983, 0.0
    %v1102 = vmax.f32 %v988, 0.0
    %v1103 = vmax.f32 %v991, 0.0
    %v1104 = vmax.f32 %v996, 0.0
    %v1105 = vmax.f32 %v999, 0.0
    %v1106 = vmax.f32 %v1004, 0.0
    %v1107 = vmax.f32 %v1007, 0.0
    %v1108 = vmax.f32 %v1012, 0.0
    %v1109 = vmax.f32 %v1015, 0.0
    %v1110 = vmax.f32 %v1020, 0.0
    %v1111 = vmax.f32 %v1023, 0.0
    %v1112 = vmax.f32 %v1028, 0.0
    %v1113 = vmax.f32 %v1031, 0.0
    %v1114 = vmax.f32 %v1036, 0.0
    %v1115 = vmax.f32 %v1039, 0.0
    %v1116 = vmax.f32 %v1044, 0.0
    %v1117 = vmax.f32 %v1047, 0.0
    %v1118 = vmax.f32 %v1052, 0.0
    %v1119 = vmax.f32 %v1055, 0.0
    %v1120 = vmax.f32 %v1060, 0.0
    %v1121 = vmax.f32 %v1063, 0.0
    %v1122 = vmax.f32 %v1068, 0.0
    %v1123 = vmax.f32 %v1071, 0.0
    %v1124 = vmax.f32 %v1076, 0.0
    %v1125 = vmax.f32 %v1079, 0.0
    %v1126 = vmax.f32 %v1084, 0.0
    %v1127 = vmax.f32 %v1087, 0.0
    %v1128 = vmax.f32 %v1092, 0.0
    %v1129 = vmax.f32 %v1095, 0.0
    %v1130 = vld [vmem:[%s7] sm:$0x1]
    %v1131 = vpack.c.bf16 %v1099, %v1098
    %v1132 = vpack.c.bf16 %v1101, %v1100
    %v1133 = vpack.c.bf16 %v1103, %v1102
    %v1134 = vpack.c.bf16 %v1105, %v1104
    %v1135 = vpack.c.bf16 %v1107, %v1106
    %v1136 = vpack.c.bf16 %v1109, %v1108
    %v1137 = vpack.c.bf16 %v1111, %v1110
    %v1138 = vpack.c.bf16 %v1113, %v1112
    %v1139 = vpack.c.bf16 %v1115, %v1114
    %v1140 = vpack.c.bf16 %v1117, %v1116
    %v1141 = vpack.c.bf16 %v1119, %v1118
    %v1142 = vpack.c.bf16 %v1121, %v1120
    %v1143 = vpack.c.bf16 %v1123, %v1122
    %v1144 = vpack.c.bf16 %v1125, %v1124
    %v1145 = vpack.c.bf16 %v1127, %v1126
    %v1146 = vpack.c.bf16 %v1129, %v1128
    %v1147 = vld [vmem:[#allocation2] sm:$0x1]
    %1149 = vset.pattern.permute.xlu0 0
    %1150 = vperm.xlu0 %1149, %v1147
    %v1151 = vpop.permute.xlu0 %1150
    %v1153 = vlaneseq
    %v1154 = vshrl.u32 %v1153, 7
    %v1155 = vsub.s32 0, %v1154
    %v1156 = vrot.slane %v1151, %v1155
    %vm1157 = vcmask 523264
    %v1159 = vsel %vm1157, %v1130, 0
    %v1162 = vsel %vm1157, %v1131, 0
    %v1165 = vsel %vm1157, %v1132, 0
    %v1168 = vsel %vm1157, %v1133, 0
    %v1171 = vsel %vm1157, %v1134, 0
    %v1174 = vsel %vm1157, %v1135, 0
    %v1177 = vsel %vm1157, %v1136, 0
    %v1180 = vsel %vm1157, %v1137, 0
    %v1183 = vsel %vm1157, %v1138, 0
    %v1186 = vsel %vm1157, %v1139, 0
    %v1189 = vsel %vm1157, %v1140, 0
    %v1192 = vsel %vm1157, %v1141, 0
    %v1195 = vsel %vm1157, %v1142, 0
    %v1198 = vsel %vm1157, %v1143, 0
    %v1201 = vsel %vm1157, %v1144, 0
    %v1204 = vsel %vm1157, %v1145, 0
    %v1207 = vsel %vm1157, %v1146, 0
    %1209 = vmatprep.subr.bf16.mxu0 0
    %1210 = vmatpush1.bf16.xpose.msra.mxu0 %v1162
    %1211 = vmatprep.subr.bf16.mxu0 0
    %1212 = vmatpush1.bf16.xpose.msra.mxu0 %v1165
    %1213 = vmatprep.subr.bf16.mxu0 0
    %1214 = vmatpush1.bf16.xpose.msra.mxu0 %v1168
    %1215 = vmatprep.subr.bf16.mxu0 0
    %1216 = vmatpush1.bf16.xpose.msra.mxu0 %v1171
    %1217 = vmatprep.subr.bf16.mxu0 0
    %1218 = vmatpush1.bf16.xpose.msra.mxu0 %v1174
    %1219 = vmatprep.subr.bf16.mxu0 0
    %1220 = vmatpush1.bf16.xpose.msra.mxu0 %v1177
    %1221 = vmatprep.subr.bf16.mxu0 0
    %1222 = vmatpush1.bf16.xpose.msra.mxu0 %v1180
    %1223 = vmatprep.subr.bf16.mxu0 0
    %1224 = vmatpush1.bf16.xpose.msra.mxu0 %v1183
    %1225 = vmatprep.subr.bf16.mxu0 0
    %1226 = vmatpush1.bf16.xpose.msra.mxu0 %v1186
    %1227 = vmatprep.subr.bf16.mxu0 0
    %1228 = vmatpush1.bf16.xpose.msra.mxu0 %v1189
    %1229 = vmatprep.subr.bf16.mxu0 0
    %1230 = vmatpush1.bf16.xpose.msra.mxu0 %v1192
    %1231 = vmatprep.subr.bf16.mxu0 0
    %1232 = vmatpush1.bf16.xpose.msra.mxu0 %v1195
    %1233 = vmatprep.subr.bf16.mxu0 0
    %1234 = vmatpush1.bf16.xpose.msra.mxu0 %v1198
    %1235 = vmatprep.subr.bf16.mxu0 0
    %1236 = vmatpush1.bf16.xpose.msra.mxu0 %v1201
    %1237 = vmatprep.subr.bf16.mxu0 0
    %1238 = vmatpush1.bf16.xpose.msra.mxu0 %v1204
    %1239 = vmatprep.subr.bf16.mxu0 0
    %1240 = vmatpush1.bf16.xpose.msra.mxu0 %v1207
    %1241 = vmatprep.mubr.bf16.mxu0 0
    %1242 = vmatmul.mubr.bf16.gmra.mrb[0].mxu0 %v1159
    %v1243 = vpop.f32.mrb[0].mxu0
    %v1244 = vadd.f32 %v1156, %v1243
    %v1245 = vpop.f32.mrb[0].mxu0
    %v1246 = vadd.f32 %v1156, %v1245
    %v1247 = vpop.f32.mrb[0].mxu0
    %v1248 = vpop.f32.mrb[0].mxu0
    %1249 = vdwg.mxu0
    %v1250 = vxor.u32 %v1244, 2147483648
    %v1251 = vxor.u32 %v1246, 2147483648
    %v1252 = vmul.f32 %v1250, 1.442695
    %v1253 = vpow.pop %v1252
    %v1254 = vmul.f32 %v1251, 1.442695
    %v1255 = vpow.pop %v1254
    %v1256 = vadd.f32 %v1253, 1.0
    %v1257 = vadd.f32 %v1255, 1.0
    %v1258 = vrcp.pop %v1256
    %v1259 = vmul.f32 1.0, %v1258
    %v1260 = vrcp.pop %v1257
    %v1261 = vmul.f32 1.0, %v1260
    %v1264 = vcombine.low %v1259, %v1261
    %v1266 = vunpack.c.l.s4 1966171168
    %v1267 = vunpack.c.0.s8 %v1266
    %v1268 = vlaneseq
    %v1269 = vshrl.u32 %v1268, 7
    %v1270 = vsub.s32 %v1267, %v1269
    %v1271 = vrot.slane %v1264, %v1270
    %v1273 = vunpack.c.l.s4 1966171168
    %v1274 = vunpack.c.0.s8 %v1273
    %v1275 = vlaneseq
    %v1276 = vshrl.u32 %v1275, 7
    %v1277 = vsub.s32 %v1274, %v1276
    %v1278 = vrot.slane %v1271, %v1277
    %v1280 = vlaneseq
    %vm1281 = vcmp.ge.s32.totalorder %v1280, 0
    %vm1282 = vcmp.lt.s32.totalorder %v1280, 256
    %vm1283 = vmand %vm1281, %vm1282
    %1284 = vst.msk [vmem:[#allocation3] sm:$0x3] %vm1283, %v1278
    // Predicated region
    $region38: #{tpu_custom_call.1} parent=1 // pred_check
      _
    $region39: #{tpu_custom_call.1} parent=1 // pred_check_branch
      %1286 = sbr.rel (0) target = $region41
    $region40: #{tpu_custom_call.1} parent=1 // pred_region
      %s1288 = ssub.s32 32, 32
      %1289 = vsyncadd [#allocation4], %s1288
      %s1291 = sshll.u32 [#allocation3], 4
      %s1292 = int_to_ptr.vmem [resolvable:$true] %s1291
      %1294 = dma.vmem_to_hbm [thread:$0]  %s1292, 32, %s9, [#allocation4]
    $region41: #{tpu_custom_call.1} parent=1 // pred_fallthru
      _
    // Predicated region
    $region42: #{tpu_custom_call.1} parent=1 // pred_check
      _
    $region43: #{tpu_custom_call.1} parent=1 // pred_check_branch
      %1296 = sbr.rel (0) target = $region45
    $region44: #{tpu_custom_call.1} parent=1 // pred_region
      %1297 = dma.done [#allocation4], 32
    $region45: #{tpu_custom_call.1} parent=1 // pred_fallthru
      _
    %1298 = vsyncpa [#allocation4], 1

</llo_original>
